<compile_context>
chip_gen: v5e
topology: v5e:2x2
jax: 0.10.0
libtpu: 0.0.40
codegen_flags: <defaults>
</compile_context>

<pallas_src>
import jax
import jax.numpy as jnp
from jax import lax
from jax.experimental import pallas as pl
from jax.experimental.pallas import tpu as pltpu


def _round_up(x: int, m: int) -> int:
    return ((x + m - 1) // m) * m


def _sublane_multiple(dtype) -> int:
    itemsize = jnp.dtype(dtype).itemsize
    if itemsize >= 4:
        return 8
    if itemsize == 2:
        return 16
    return 32


def _vmem_budget_bytes() -> int:
    cap = 64 * 1024 * 1024  # conservative default (v7x per-TC physical VMEM)
    try:
        cap = int(pltpu.get_tpu_info().vmem_capacity_bytes)
    except Exception:
        pass
    return int(cap * 0.75)  # leave headroom for compiler scratch / semaphores


# ---------------------------------------------------------------------------
# Kernels
# ---------------------------------------------------------------------------

def _rotate_kernel_resident_w(base_ref, w_ref, out_ref):
    """Fast path: K untiled, weight VMEM-resident; direct store, no accumulator."""
    x = base_ref[...].astype(w_ref.dtype)          # in-kernel cast (mirrors base.to(w.dtype))
    out_ref[...] = jnp.dot(
        x, w_ref[...], preferred_element_type=jnp.float32
    ).astype(out_ref.dtype)


def _make_ktiled_kernel(k_rem: int, tk: int):
    """Fallback: K tiled (innermost 'arbitrary' axis) with f32 accumulator."""

    def kernel(base_ref, w_ref, out_ref, acc_ref):
        k = pl.program_id(2)
        nk = pl.num_programs(2)

        @pl.when(k == 0)
        def _():
            acc_ref[...] = jnp.zeros_like(acc_ref)

        x = base_ref[...]
        if k_rem != tk:
            # Last K block of `base` is a partial edge block: out-of-bounds lanes
            # contain unspecified bits (possibly NaN).  Mask them to zero so they
            # contribute nothing (the weight's padded K rows are explicit zeros).
            col = lax.broadcasted_iota(jnp.int32, x.shape, 1)
            limit = jnp.where(k == nk - 1, k_rem, tk)
            x = jnp.where(col < limit, x, jnp.zeros_like(x))

        acc_ref[...] += jnp.dot(
            x.astype(w_ref.dtype), w_ref[...], preferred_element_type=jnp.float32
        )

        @pl.when(k == nk - 1)
        def _():
            out_ref[...] = acc_ref[...].astype(out_ref.dtype)

    return kernel


# ---------------------------------------------------------------------------
# Wrapper
# ---------------------------------------------------------------------------

def rotate_layer(
    base: jax.Array,
    weight: jax.Array,
    *,
    tm_max: int = 512,
    tn_max: int = 256,
    tk_max: int = 2048,
) -> jax.Array:
    """Pallas equivalent of RotateLayer.forward: base @ weight."""
    base_dim, low_rank_dim = weight.shape
    orig_shape = base.shape
    assert orig_shape[-1] == base_dim

    # Flatten leading dims.  Keep the base in its native dtype (cast in-kernel).
    base2d = base.reshape(-1, base_dim)
    m = base2d.shape[0]
    out_dtype = weight.dtype
    bi = jnp.dtype(base2d.dtype).itemsize
    wi = jnp.dtype(weight.dtype).itemsize

    # ----- N: lane-dense output; pad only the (tiny) weight's columns. -----
    n_pad = _round_up(low_rank_dim, 128)
    w = weight
    if n_pad != low_rank_dim:
        w = jnp.pad(weight, ((0, 0), (0, n_pad - low_rank_dim)))
    # tn: the largest multiple of 128 that divides n_pad and is <= tn_max.
    tn = n_pad
    if tn > tn_max:
        tn = 128
        d = tn_max // 128
        while d >= 1:
            if n_pad % (d * 128) == 0:
                tn = d * 128
                break
            d -= 1
    grid_n = n_pad // tn

    # ----- M: never pad the input; balanced, dtype-aware sublane-aligned tile. -----
    sub = max(_sublane_multiple(base2d.dtype), _sublane_multiple(out_dtype))
    n_m_tiles = -(-m // tm_max)
    if n_m_tiles <= 1:
        tm = m  # single tile covering the full (possibly unaligned) batch
    else:
        tm = _round_up(-(-m // n_m_tiles), sub)
    grid_m = pl.cdiv(m, tm)

    vmem_budget = _vmem_budget_bytes()

    # ----- K: keep it untiled (weight resident) whenever the footprint fits. -----
    resident_fp = 2 * tm * base_dim * bi + 2 * base_dim * tn * wi + 2 * tm * tn * wi

    cost = pl.CostEstimate(
        flops=2 * m * base_dim * n_pad,
        transcendentals=0,
        bytes_accessed=m * base_dim * bi + base_dim * n_pad * wi + m * n_pad * wi,
    )

    if resident_fp <= vmem_budget:
        # --- Fast path: grid (N, M), N outermost so the weight tile is DMA'd
        #     once per N tile and stays VMEM-resident across all M tiles. ---
        out = pl.pallas_call(
            _rotate_kernel_resident_w,
            out_shape=jax.ShapeDtypeStruct((m, n_pad), out_dtype),
            grid_spec=pltpu.PrefetchScalarGridSpec(
                num_scalar_prefetch=0,
                grid=(grid_n, grid_m),
                in_specs=[
                    pl.BlockSpec((tm, base_dim), lambda j, i: (i, 0)),
                    pl.BlockSpec((base_dim, tn), lambda j, i: (0, j)),
                ],
                out_specs=pl.BlockSpec((tm, tn), lambda j, i: (i, j)),
            ),
            compiler_params=pltpu.CompilerParams(
                dimension_semantics=("parallel", "parallel"),
                vmem_limit_bytes=vmem_budget,
            ),
            cost_estimate=cost,
        )(base2d, w)
    else:
        # --- Fallback for very large base_dim: tile K with an f32 accumulator. ---
        k128 = _round_up(base_dim, 128)
        tk = _round_up(min(tk_max, k128), 128)

        def fp_tiled(tk_):
            return (2 * tm * tk_ * bi + 2 * tk_ * tn * wi
                    + 2 * tm * tn * wi + tm * tn * 4)

        while tk > 128 and fp_tiled(tk) > vmem_budget:
            tk -= 128

        nk = -(-base_dim // tk)
        k_pad_w = nk * tk
        if k_pad_w != base_dim:
            # Cheap: only the small weight gets zero-padded rows in HBM.
            w = jnp.pad(w, ((0, k_pad_w - base_dim), (0, 0)))
        k_rem = base_dim - (nk - 1) * tk

        out = pl.pallas_call(
            _make_ktiled_kernel(k_rem, tk),
            out_shape=jax.ShapeDtypeStruct((m, n_pad), out_dtype),
            grid_spec=pltpu.PrefetchScalarGridSpec(
                num_scalar_prefetch=0,
                grid=(grid_m, grid_n, nk),
                in_specs=[
                    pl.BlockSpec((tm, tk), lambda i, j, k: (i, k)),
                    pl.BlockSpec((tk, tn), lambda i, j, k: (k, j)),
                ],
                out_specs=pl.BlockSpec((tm, tn), lambda i, j, k: (i, j)),
                scratch_shapes=[pltpu.VMEM((tm, tn), jnp.float32)],
            ),
            compiler_params=pltpu.CompilerParams(
                dimension_semantics=("parallel", "parallel", "arbitrary"),
                vmem_limit_bytes=vmem_budget,
            ),
            cost_estimate=cost,
        )(base2d, w)

    if n_pad != low_rank_dim:
        out = out[:, :low_rank_dim]
    return out.reshape(*orig_shape[:-1], low_rank_dim)


def make_orthogonal_weight(key, base_dim: int, low_rank_dim: int, dtype=jnp.float32):
    """Deterministic orthogonal init (mirrors torch.nn.init.orthogonal_)."""
    assert base_dim > low_rank_dim, "Low-rank dimension should lower than the base"
    a = jax.random.normal(key, (base_dim, low_rank_dim), dtype=jnp.float32)
    q, r = jnp.linalg.qr(a)
    q = q * jnp.sign(jnp.diag(r))[None, :]
    return q.astype(dtype)


if __name__ == "__main__":
    key = jax.random.PRNGKey(0)
    k_w, k_x, k_w2, k_x2 = jax.random.split(key, 4)

    # Primary check: small, module-consistent shapes.
    batch = 16
    base_dim = 32
    low_rank_dim = 16

    weight = make_orthogonal_weight(k_w, base_dim, low_rank_dim)
    base = jax.random.normal(k_x, (batch, base_dim), dtype=jnp.float32)

    out = rotate_layer(base, weight)
    out = jax.block_until_ready(out)

    ref = base.astype(weight.dtype) @ weight
    assert out.shape == (batch, low_rank_dim)
    assert jnp.allclose(out, ref, atol=1e-5, rtol=1e-5)

    # Extra check: ragged batch / non-128 dims and a leading (batch, seq) shape.
    weight2 = make_orthogonal_weight(k_w2, 40, 12)
    base2 = jax.random.normal(k_x2, (2, 5, 40), dtype=jnp.float32)
    out2 = jax.block_until_ready(rotate_layer(base2, weight2))
    ref2 = base2 @ weight2
    assert out2.shape == (2, 5, 12)
    assert jnp.allclose(out2, ref2, atol=1e-5, rtol=1e-5)

    print("KERNEL_OK")
</pallas_src>

<mosaic_0001>
module attributes {stable_mosaic.version = 11 : i64} {
  func.func @_rotate_kernel_resident_w(%arg0: i32, %arg1: i32, %arg2: memref<16x32xf32, #tpu.memory_space<vmem>>, %arg3: memref<32x128xf32, #tpu.memory_space<vmem>>, %arg4: memref<16x128xf32, #tpu.memory_space<vmem>>) attributes {dimension_semantics = [#tpu.dimension_semantics<parallel>, #tpu.dimension_semantics<parallel>], iteration_bounds = array<i64: 1, 1>, scalar_prefetch = 0 : i64, scratch_operands = 0 : i64, tpu.core_type = #tpu.core_type<tc>, window_params = [{transform_indices = @transform_0, window_bounds = array<i64: 16, 32>}, {transform_indices = @transform_1, window_bounds = array<i64: 32, 128>}, {transform_indices = @transform_2, window_bounds = array<i64: 16, 128>}]} {
    %c0 = arith.constant 0 : index
    %c0_0 = arith.constant 0 : index
    %0 = vector.load %arg2[%c0, %c0_0] : memref<16x32xf32, #tpu.memory_space<vmem>>, vector<16x32xf32>
    %c0_1 = arith.constant 0 : index
    %c0_2 = arith.constant 0 : index
    %1 = vector.load %arg3[%c0_1, %c0_2] : memref<32x128xf32, #tpu.memory_space<vmem>>, vector<32x128xf32>
    %cst = arith.constant dense<0.000000e+00> : vector<16x128xf32>
    %2 = tpu.matmul %0, %1, %cst {dimension_numbers = #tpu.dot_dimension_numbers<[1], [0], [0], [1], [0, 0, 1, 1], [], []>} : vector<16x32xf32>, vector<32x128xf32>, vector<16x128xf32> -> vector<16x128xf32>
    %c0_3 = arith.constant 0 : index
    %c0_4 = arith.constant 0 : index
    %3 = vector.load %arg4[%c0_3, %c0_4] : memref<16x128xf32, #tpu.memory_space<vmem>>, vector<16x128xf32>
    tpu.vector_store %arg4[%c0_3, %c0_4], %2 {strides = array<i32>} : memref<16x128xf32, #tpu.memory_space<vmem>>, vector<16x128xf32>,
    return
  }
  func.func @transform_0(%arg0: i32, %arg1: i32) -> (i32, i32) {
    %c0_i32 = arith.constant 0 : i32
    %c0_i32_0 = arith.constant 0 : i32
    return %arg1, %c0_i32 : i32, i32
  }
  func.func @transform_1(%arg0: i32, %arg1: i32) -> (i32, i32) {
    %c0_i32 = arith.constant 0 : i32
    %c0_i32_0 = arith.constant 0 : i32
    return %c0_i32, %arg0 : i32, i32
  }
  func.func @transform_2(%arg0: i32, %arg1: i32) -> (i32, i32) {
    %c0_i32 = arith.constant 0 : i32
    return %arg1, %arg0 : i32, i32
  }
}

</mosaic_0001>

<llo_original>
// kernel: tpu_custom_call.1
$region0: #{tpu_custom_call.1}
  #allocation0 [shape = 'u32[]', space=smem, size = 0x4, offset = 0x4, fixed_abs, tag = 'smem constant byte address 0x4 - core index']
  #allocation1 [shape = 'u32[72,128]{1,0:T(1,128)}', space=vmem, size = 0x9000, scoped, tag = 'internal scratch']
  %s0 = inlined_call_operand.hbm [shape: f32[16,32], index: 0, kind: input, shape index: {}]
  %s1 = inlined_call_operand.hbm [shape: f32[32,128], index: 1, kind: input, shape index: {}]
  %s2 = inlined_call_operand.hbm [shape: f32[16,128], index: 2, kind: output, shape index: {}]
  %s3 = sld [smem:[#allocation0]]
  $region26: #{tpu_custom_call.1} parent=0
    _
  %s5 = ssub.s32 1, %s3
  %s6 = scalar_select 0, %s5, %s3
  $region1: #{tpu_custom_call.1} parent=0
    #allocation2 [shape = 'u8[8192]{0}', space=vmem, size = 0x2000, scoped, tag = 'input window, operand 0, single buffered']
    #allocation3 [shape = 's32[1]{0}', space=sflag, size = 0x4, scoped, tag = 'scoped memory for tpu_custom_call.1']
    #allocation4 [shape = 's32[1]{0}', space=sflag, size = 0x4, scoped, tag = 'scoped memory for tpu_custom_call.1']
    #allocation5 [shape = 'u8[16384]{0}', space=vmem, size = 0x4000, scoped, tag = 'input window, operand 1, single buffered']
    #allocation6 [shape = 's32[1]{0}', space=sflag, size = 0x4, scoped, tag = 'scoped memory for tpu_custom_call.1']
    #allocation7 [shape = 'u8[8192]{0}', space=vmem, size = 0x2000, scoped, tag = 'output window, operand 0, single buffered']
    %7 = vsyncpa [#allocation3], 0
    %8 = vsyncpa [#allocation6], 0
    %9 = vsyncpa [#allocation4], 0
    // Predicated region
    $region2: #{tpu_custom_call.1} parent=1 // pred_check
      _
    $region3: #{tpu_custom_call.1} parent=1 // pred_check_branch
      %11 = sbr.rel (0) target = $region5
    $region4: #{tpu_custom_call.1} parent=1 // pred_region
      %13 = vsyncadd [#allocation3], 0
      %s14 = sshll.u32 %s0, 4
      %s15 = int_to_ptr.hbm [resolvable:$true] %s14
      %s16 = sshll.u32 [#allocation2], 4
      %s17 = int_to_ptr.vmem [resolvable:$true] %s16
      %22 = dma.hbm_to_vmem [thread:$0]  %s15, 256, %s17, [#allocation3], 128, 128, 8
    $region5: #{tpu_custom_call.1} parent=1 // pred_fallthru
      _
    // Predicated region
    $region6: #{tpu_custom_call.1} parent=1 // pred_check
      _
    $region7: #{tpu_custom_call.1} parent=1 // pred_check_branch
      %24 = sbr.rel (0) target = $region9
    $region8: #{tpu_custom_call.1} parent=1 // pred_region
      %26 = vsyncadd [#allocation6], 0
      %s27 = sshll.u32 %s1, 4
      %s28 = int_to_ptr.hbm [resolvable:$true] %s27
      %s29 = sshll.u32 [#allocation5], 4
      %s30 = int_to_ptr.vmem [resolvable:$true] %s29
      %35 = dma.hbm_to_vmem [thread:$0]  %s28, 512, %s30, [#allocation6], 128, 128, 8
    $region9: #{tpu_custom_call.1} parent=1 // pred_fallthru
      _
    // Predicated region
    $region10: #{tpu_custom_call.1} parent=1 // pred_check
      _
    $region11: #{tpu_custom_call.1} parent=1 // pred_check_branch
      %37 = sbr.rel (0) target = $region13
    $region12: #{tpu_custom_call.1} parent=1 // pred_region
      %39 = dma.done [#allocation3], 256
    $region13: #{tpu_custom_call.1} parent=1 // pred_fallthru
      _
    // Predicated region
    $region14: #{tpu_custom_call.1} parent=1 // pred_check
      _
    $region15: #{tpu_custom_call.1} parent=1 // pred_check_branch
      %41 = sbr.rel (0) target = $region17
    $region16: #{tpu_custom_call.1} parent=1 // pred_region
      %43 = dma.done [#allocation6], 512
    $region17: #{tpu_custom_call.1} parent=1 // pred_fallthru
      _
    %v44 = vld [vmem:[#allocation2] sm:$0xff]
    %v45 = vld [vmem:[#allocation2 + $0x8] sm:$0xff]
    %v46 = vld [vmem:[#allocation5] sm:$0xff]
    %v47 = vld [vmem:[#allocation5 + $0x8] sm:$0xff]
    %v48 = vld [vmem:[#allocation5 + $0x10] sm:$0xff]
    %v49 = vld [vmem:[#allocation5 + $0x18] sm:$0xff]
    %vm50 = vcmask 261120
    %v52 = vsel %vm50, %v44, 0
    %v55 = vsel %vm50, %v45, 0
    %57 = vmatpush.msra.mxu0 0.0
    %58 = vmatpush.msra.mxu0 0.0
    %59 = vmatpush.msra.mxu0 0.0
    %60 = vmatpush.msra.mxu0 0.0
    %61 = vmatpush.msra.mxu0 0.0
    %62 = vmatpush.msra.mxu0 0.0
    %63 = vmatpush.msra.mxu0 0.0
    %64 = vmatpush.msra.mxu0 0.0
    %65 = vmatpush.msra.mxu0 0.0
    %66 = vmatpush.msra.mxu0 0.0
    %67 = vmatpush.msra.mxu0 0.0
    %68 = vmatpush.msra.mxu0 0.0
    %69 = vmatpush.msra.mxu0 %v49
    %70 = vmatpush.msra.mxu0 %v48
    %71 = vmatpush.msra.mxu0 %v47
    %72 = vmatpush.msra.mxu0 %v46
    %73 = vmatmul.f32.gmra.mxu0 %v52
    %v74 = vpop.f32.mrf.mxu0
    %v75 = vadd.f32 0.0, %v74
    %76 = vmatmul.f32.gmra.mxu0 %v55
    %v77 = vpop.f32.mrf.mxu0
    %v78 = vadd.f32 0.0, %v77
    %79 = vdwg.mxu0
    %80 = vst [vmem:[#allocation7] sm:$0xff] %v75
    %81 = vst [vmem:[#allocation7 + $0x8] sm:$0xff] %v78
    // Predicated region
    $region18: #{tpu_custom_call.1} parent=1 // pred_check
      _
    $region19: #{tpu_custom_call.1} parent=1 // pred_check_branch
      %83 = sbr.rel (0) target = $region21
    $region20: #{tpu_custom_call.1} parent=1 // pred_region
      %85 = vsyncadd [#allocation4], 0
      %s86 = sshll.u32 [#allocation7], 4
      %s87 = int_to_ptr.vmem [resolvable:$true] %s86
      %s88 = sshll.u32 %s2, 4
      %s89 = int_to_ptr.hbm [resolvable:$true] %s88
      %94 = dma.vmem_to_hbm [thread:$0]  %s87, 256, %s89, [#allocation4], 128, 128, 8
    $region21: #{tpu_custom_call.1} parent=1 // pred_fallthru
      _
    // Predicated region
    $region22: #{tpu_custom_call.1} parent=1 // pred_check
      _
    $region23: #{tpu_custom_call.1} parent=1 // pred_check_branch
      %96 = sbr.rel (0) target = $region25
    $region24: #{tpu_custom_call.1} parent=1 // pred_region
      %98 = dma.done [#allocation4], 256
    $region25: #{tpu_custom_call.1} parent=1 // pred_fallthru
      _
    %99 = vsyncpa [#allocation3], 1
    %100 = vsyncpa [#allocation6], 1
    %101 = vsyncpa [#allocation4], 1

</llo_original>
